<compile_context>
chip_gen: v6e
topology: v6e:2x2x1
jax: 0.10.0
libtpu: 0.0.40
codegen_flags: <defaults>
</compile_context>

<pallas_src>
import functools

import numpy as np
import jax
import jax.numpy as jnp
from jax import lax
from jax.experimental import pallas as pl
from jax.experimental.pallas import tpu as pltpu

_NEG_BIG = -1e30  # finite "minus infinity" for masking padded class columns


def _round_up(x, m):
    return ((x + m - 1) // m) * m


def _vmem_capacity_bytes():
    """Physical VMEM of the attached TPU; conservative fallback if the query fails."""
    try:
        info = pltpu.get_tpu_info()
        cap = int(getattr(info, "vmem_capacity_bytes", 0) or 0)
        if cap > 0:
            return cap
    except Exception:
        pass
    return 64 * 1024 * 1024  # safe for every generation (v7x has 64 MiB)


# ----------------------------------------------------------------------------
# Deterministic parameter init (replicates rvs() from the PyTorch module).
# ----------------------------------------------------------------------------
def rvs(dim, seed=0):
    random_state = np.random.RandomState(seed)
    H = np.eye(dim)
    D = np.ones((dim,))
    for n in range(1, dim):
        x = random_state.normal(size=(dim - n + 1,))
        D[n - 1] = np.sign(x[0])
        x[0] -= D[n - 1] * np.sqrt((x * x).sum())
        Hx = np.eye(dim - n + 1) - 2.0 * np.outer(x, x) / (x * x).sum()
        mat = np.eye(dim)
        mat[n - 1:, n - 1:] = Hx
        H = np.dot(H, mat)
    D[-1] = (-1) ** (1 - dim % 2) * D.prod()
    H = (D * H.T).T
    return H


# ----------------------------------------------------------------------------
# Pallas kernels.  Grid = (batch_tiles, k_tiles); K (feature) axis is last.
# ----------------------------------------------------------------------------
def _train_kernel(x_ref, wt_ref, labels_ref, *refs, inv_temp, num_classes,
                  c_pad, write_logits):
    if write_logits:
        logits_ref, nll_ref, acc_ref = refs
    else:
        logits_ref = None
        nll_ref, acc_ref = refs

    k = pl.program_id(1)

    @pl.when(k == 0)
    def _():
        acc_ref[...] = jnp.zeros_like(acc_ref)

    acc_ref[...] += jnp.dot(x_ref[...], wt_ref[...],
                            preferred_element_type=jnp.float32)

    @pl.when(k == pl.num_programs(1) - 1)
    def _():
        logits = acc_ref[...]
        if write_logits:
            logits_ref[...] = logits.astype(logits_ref.dtype)

        tile_b = logits.shape[0]
        col = lax.broadcasted_iota(jnp.int32, (tile_b, c_pad), 1)

        scaled = logits * inv_temp
        if c_pad != num_classes:  # mask padded class columns out of the softmax
            scaled = jnp.where(col < num_classes, scaled, _NEG_BIG)

        m = jnp.max(scaled, axis=1, keepdims=True)
        shifted = scaled - m
        lse = jnp.log(jnp.sum(jnp.exp(shifted), axis=1, keepdims=True))
        logp = shifted - lse                               # log-softmax, f32

        # select the target log-prob via compare+select (no one-hot from HBM)
        onehot = col == labels_ref[...]                    # (tile_b, 1) broadcast
        nll = -jnp.sum(jnp.where(onehot, logp, 0.0), axis=1)   # (tile_b,)
        nll_ref[...] = nll.reshape(1, tile_b)              # lane-dense store


def _eval_kernel(x_ref, wt_ref, *refs, num_classes, c_pad, write_probs):
    if write_probs:
        probs_ref, ent_ref, acc_ref = refs
    else:
        probs_ref = None
        ent_ref, acc_ref = refs

    k = pl.program_id(1)

    @pl.when(k == 0)
    def _():
        acc_ref[...] = jnp.zeros_like(acc_ref)

    acc_ref[...] += jnp.dot(x_ref[...], wt_ref[...],
                            preferred_element_type=jnp.float32)

    @pl.when(k == pl.num_programs(1) - 1)
    def _():
        logits = acc_ref[...]
        tile_b = logits.shape[0]

        valid = None
        if c_pad != num_classes:
            col = lax.broadcasted_iota(jnp.int32, (tile_b, c_pad), 1)
            valid = col < num_classes
            logits = jnp.where(valid, logits, _NEG_BIG)

        m = jnp.max(logits, axis=1, keepdims=True)
        shifted = logits - m
        e = jnp.exp(shifted)
        denom = jnp.sum(e, axis=1, keepdims=True)
        # approx EUP reciprocal (free slot) + one Newton step -> ~f32 accurate.
        inv = pl.reciprocal(denom, approx=True)
        inv = inv * (2.0 - denom * inv)
        p = e * inv
        logp = shifted - jnp.log(denom)                    # log-softmax directly:
        if write_probs:                                    # no log(p), no 0*log(0) NaN
            probs_ref[...] = p.astype(probs_ref.dtype)

        terms = p * logp
        if valid is not None:
            terms = jnp.where(valid, terms, 0.0)
        ent_ref[...] = jnp.sum(terms, axis=1).reshape(1, tile_b)   # lane-dense


def _logits_kernel(x_ref, wt_ref, logits_ref, acc_ref):
    k = pl.program_id(1)

    @pl.when(k == 0)
    def _():
        acc_ref[...] = jnp.zeros_like(acc_ref)

    acc_ref[...] += jnp.dot(x_ref[...], wt_ref[...],
                            preferred_element_type=jnp.float32)

    @pl.when(k == pl.num_programs(1) - 1)
    def _():
        logits_ref[...] = acc_ref[...].astype(logits_ref.dtype)


# ----------------------------------------------------------------------------
# Wrapper.
# ----------------------------------------------------------------------------
class PrototypeLossPallas:
    """PrototypeLoss forward pass.

    Notes:
      * use_bf16_matmul=True (default) feeds bf16 operands to the MXU with f32
        accumulation; returned logits then match the f32 reference only loosely
        (~1e-2), while the loss is typically within a few 1e-3.  Set
        use_bf16_matmul=False for bit-faithful f32 numerics.
      * return_logits=False gives a loss-only path that skips the (B, C)
        logits/probs HBM writeback.
      * return_padded=True returns the batch/class padded arrays (avoids the
        post-kernel slice copy); default keeps the PyTorch (B, C) shapes.
    """

    def __init__(self, feat_dim, num_classes, temp, *,
                 use_bf16_matmul=True, max_tile_b=None, max_tile_k=512,
                 resident_k_threshold=1024, logits_dtype=jnp.float32,
                 core_parallel=False):
        assert num_classes <= feat_dim, "rvs() only provides feat_dim prototype rows"
        self.temp = float(temp)
        self.num_classes = int(num_classes)
        self.feat_dim = int(feat_dim)
        self.c_pad = _round_up(self.num_classes, 128)     # lane-dense class dim
        self.logits_dtype = logits_dtype
        self.core_parallel = bool(core_parallel)
        self.matmul_dtype = jnp.bfloat16 if use_bf16_matmul else jnp.float32

        # Generation-aware VMEM budget / tile_b ceiling.
        self.vmem_cap = _vmem_capacity_bytes()
        if max_tile_b is None:
            # 128 MiB chips (v5e/v6e) amortize per-step overhead better with 512;
            # keep 256 on v7x (64 MiB) / unknown.
            max_tile_b = 512 if self.vmem_cap >= 96 * 1024 * 1024 else 256
        assert max_tile_b % 8 == 0
        self.max_tile_b = int(max_tile_b)

        # K (feature) axis tiling: resident W for small D, streamed (tile_k, c_pad)
        # panels for large D so the kernel fits v7x's 64 MiB VMEM.
        D = self.feat_dim
        if D <= int(resident_k_threshold):
            self.tile_k = D
            self.d_pad = D
        else:
            assert max_tile_k % 128 == 0
            self.tile_k = int(max_tile_k)
            self.d_pad = _round_up(D, self.tile_k)
        self.n_k = self.d_pad // self.tile_k

        W_np = rvs(feat_dim, seed=0)[:num_classes]        # (C, D), float64
        self.W = jnp.asarray(W_np, dtype=jnp.float32)     # (C, D) reference copy
        # Pre-transposed + zero-padded MXU operand, built once on the host.
        Wt_np = np.zeros((self.d_pad, self.c_pad), dtype=np.float32)
        Wt_np[:feat_dim, :num_classes] = W_np.T
        self.Wt = jnp.asarray(Wt_np, dtype=self.matmul_dtype)   # (D_pad, C_pad)

    # -- tiling / specs / compiler params ------------------------------------
    def _tiling(self, B):
        tile_b = min(self.max_tile_b, _round_up(B, 8))
        b_pad = _round_up(B, tile_b)
        return tile_b, b_pad

    def _w_spec(self):
        shape = (self.tile_k, self.c_pad)
        index_map = lambda i, k: (k, 0)
        if self.n_k == 1:
            # Constant block index -> fetched once; single-buffer it to halve the
            # largest static VMEM consumer.
            try:
                return pl.BlockSpec(shape, index_map, pipeline_mode=pl.Buffered(1))
            except TypeError:  # older jax without pipeline_mode kwarg
                pass
        return pl.BlockSpec(shape, index_map)

    def _specs(self, tile_b):
        x_spec = pl.BlockSpec((tile_b, self.tile_k), lambda i, k: (i, k))
        w_spec = self._w_spec()
        mat_spec = pl.BlockSpec((tile_b, self.c_pad), lambda i, k: (i, 0))
        row_spec = pl.BlockSpec((1, tile_b), lambda i, k: (0, i))    # lane-dense
        labels_spec = pl.BlockSpec((tile_b, 1), lambda i, k: (i, 0))
        return x_spec, w_spec, mat_spec, row_spec, labels_spec

    def _compiler_params(self, tile_b):
        itemsize = jnp.dtype(self.matmul_dtype).itemsize
        out_itemsize = jnp.dtype(self.logits_dtype).itemsize
        n_w_buf = 1 if self.n_k == 1 else 2
        est = (n_w_buf * self.tile_k * self.c_pad * itemsize          # W panel(s)
               + 2 * tile_b * self.tile_k * itemsize                  # x tiles
               + 2 * tile_b * self.c_pad * out_itemsize               # logits/probs tiles
               + tile_b * self.c_pad * 4                              # f32 accumulator
               + 4 * tile_b * 128 * 4                                 # labels / row outs
               + (4 << 20))                                           # headroom
        budget = int(self.vmem_cap * 0.85)    # leave room for compiler scratch
        vmem = int(min(budget, max(32 * 1024 * 1024, est)))
        if self.core_parallel:
            sem = (pltpu.CORE_PARALLEL, pltpu.ARBITRARY)
        else:
            # TODO(synk): on v7x verify in a profile that both TensorCores run;
            # if they don't, construct with core_parallel=True.
            sem = ("parallel", "arbitrary")
        return pltpu.CompilerParams(dimension_semantics=sem,
                                    vmem_limit_bytes=vmem)

    # -- forward --------------------------------------------------------------
    def __call__(self, x, labels=None, train_model=True, *,
                 return_logits=True, return_padded=False):
        B, D = x.shape
        assert D == self.feat_dim
        C, c_pad = self.num_classes, self.c_pad
        tile_b, b_pad = self._tiling(B)
        grid = (b_pad // tile_b, self.n_k)

        xp = x.astype(self.matmul_dtype)
        if b_pad != B or self.d_pad != D:
            xp = jnp.pad(xp, ((0, b_pad - B), (0, self.d_pad - D)))

        x_spec, w_spec, mat_spec, row_spec, labels_spec = self._specs(tile_b)
        params = self._compiler_params(tile_b)
        acc = pltpu.VMEM((tile_b, c_pad), jnp.float32)

        def _trim(a):
            # Avoid the extra HBM pass when no padding happened (or when the
            # caller accepts padded output).
            if return_padded or (a.shape[0] == B and a.shape[1] == C):
                return a
            return a[:B, :C]

        if train_model:
            if labels is None:
                logits_pad = pl.pallas_call(
                    _logits_kernel,
                    out_shape=jax.ShapeDtypeStruct((b_pad, c_pad), self.logits_dtype),
                    grid=grid,
                    in_specs=[x_spec, w_spec],
                    out_specs=mat_spec,
                    scratch_shapes=[acc],
                    compiler_params=params,
                )(xp, self.Wt)
                return _trim(logits_pad), jnp.float32(0.0)

            labels_col = labels.astype(jnp.int32).reshape(-1, 1)
            if b_pad != B:
                labels_col = jnp.pad(labels_col, ((0, b_pad - B), (0, 0)))

            kernel = functools.partial(
                _train_kernel, inv_temp=1.0 / self.temp,
                num_classes=C, c_pad=c_pad, write_logits=return_logits)
            if return_logits:
                out_shape = (jax.ShapeDtypeStruct((b_pad, c_pad), self.logits_dtype),
                             jax.ShapeDtypeStruct((1, b_pad), jnp.float32))
                out_specs = (mat_spec, row_spec)
            else:
                out_shape = jax.ShapeDtypeStruct((1, b_pad), jnp.float32)
                out_specs = row_spec

            out = pl.pallas_call(
                kernel,
                out_shape=out_shape,
                grid=grid,
                in_specs=[x_spec, w_spec, labels_spec],
                out_specs=out_specs,
                scratch_shapes=[acc],
                compiler_params=params,
            )(xp, self.Wt, labels_col)

            if return_logits:
                logits_pad, nll = out
                logits_out = _trim(logits_pad)
            else:
                logits_out, nll = None, out
            loss = jnp.mean(nll[0, :B])                # glue: mean over batch
            return logits_out, loss
        else:
            kernel = functools.partial(_eval_kernel, num_classes=C, c_pad=c_pad,
                                       write_probs=return_logits)
            if return_logits:
                out_shape = (jax.ShapeDtypeStruct((b_pad, c_pad), self.logits_dtype),
                             jax.ShapeDtypeStruct((1, b_pad), jnp.float32))
                out_specs = (mat_spec, row_spec)
            else:
                out_shape = jax.ShapeDtypeStruct((1, b_pad), jnp.float32)
                out_specs = row_spec

            out = pl.pallas_call(
                kernel,
                out_shape=out_shape,
                grid=grid,
                in_specs=[x_spec, w_spec],
                out_specs=out_specs,
                scratch_shapes=[acc],
                compiler_params=params,
            )(xp, self.Wt)

            if return_logits:
                probs_pad, ent = out
                probs_out = _trim(probs_pad)
            else:
                probs_out, ent = None, out
            loss = jnp.exp(jnp.mean(ent[0, :B]))       # glue: mean + exp
            return probs_out, loss


# ----------------------------------------------------------------------------
# Reference (pure JAX) for sanity checking.
# ----------------------------------------------------------------------------
def _ref_forward(W, temp, x, labels=None, train_model=True):
    logits = x @ W.T
    if train_model:
        if labels is None:
            return logits, jnp.float32(0.0)
        logp = jax.nn.log_softmax(logits / temp, axis=1)
        loss = -jnp.mean(jnp.take_along_axis(logp, labels[:, None], axis=1))
        return logits, loss
    else:
        p = jax.nn.softmax(logits, axis=1)
        loss = jnp.exp(jnp.mean(jnp.sum(p * jnp.log(p), axis=1)))
        return p, loss


if __name__ == "__main__":
    key = jax.random.PRNGKey(0)

    # -------- config 1: small, f32 strict check (resident W, single K block) ----
    B, D, C = 8, 32, 8
    temp = 0.5
    kx, kl, key = jax.random.split(key, 3)
    x = jax.random.normal(kx, (B, D), dtype=jnp.float32)
    labels = jax.random.randint(kl, (B,), 0, C, dtype=jnp.int32)

    module_f32 = PrototypeLossPallas(feat_dim=D, num_classes=C, temp=temp,
                                     use_bf16_matmul=False)

    logits, loss = module_f32(x, labels=labels, train_model=True)
    jax.block_until_ready((logits, loss))
    ref_logits, ref_loss = _ref_forward(module_f32.W, temp, x, labels, True)
    np.testing.assert_allclose(np.asarray(logits), np.asarray(ref_logits),
                               rtol=1e-5, atol=1e-5)
    np.testing.assert_allclose(np.asarray(loss), np.asarray(ref_loss),
                               rtol=1e-5, atol=1e-5)

    # train path (no labels) -> logits only
    logits0, zero = module_f32(x, labels=None, train_model=True)
    jax.block_until_ready((logits0, zero))
    np.testing.assert_allclose(np.asarray(logits0), np.asarray(ref_logits),
                               rtol=1e-5, atol=1e-5)

    # eval path
    probs, ent_loss = module_f32(x, train_model=False)
    jax.block_until_ready((probs, ent_loss))
    ref_probs, ref_ent = _ref_forward(module_f32.W, temp, x, None, False)
    np.testing.assert_allclose(np.asarray(probs), np.asarray(ref_probs),
                               rtol=1e-5, atol=1e-5)
    np.testing.assert_allclose(np.asarray(ent_loss), np.asarray(ref_ent),
                               rtol=1e-5, atol=1e-5)

    # loss-only modes (skip logits / probs HBM writeback)
    none_logits, loss_lo = module_f32(x, labels=labels, train_model=True,
                                      return_logits=False)
    jax.block_until_ready(loss_lo)
    assert none_logits is None
    np.testing.assert_allclose(np.asarray(loss_lo), np.asarray(ref_loss),
                               rtol=1e-5, atol=1e-5)
    _, ent_lo = module_f32(x, train_model=False, return_logits=False)
    jax.block_until_ready(ent_lo)
    np.testing.assert_allclose(np.asarray(ent_lo), np.asarray(ref_ent),
                               rtol=1e-5, atol=1e-5)

    # -------- config 1b: default (bf16 MXU operands), loose tolerance -----------
    module_bf16 = PrototypeLossPallas(feat_dim=D, num_classes=C, temp=temp)
    logits_b, loss_b = module_bf16(x, labels=labels, train_model=True)
    jax.block_until_ready((logits_b, loss_b))
    np.testing.assert_allclose(np.asarray(loss_b), np.asarray(ref_loss),
                               rtol=5e-2, atol=5e-2)

    # -------- config 2: exercises batch padding, class padding, K-axis tiling ---
    B2, D2, C2 = 20, 256, 10
    temp2 = 0.7
    kx2, kl2, key = jax.random.split(key, 3)
    x2 = jax.random.normal(kx2, (B2, D2), dtype=jnp.float32)
    labels2 = jax.random.randint(kl2, (B2,), 0, C2, dtype=jnp.int32)

    module2 = PrototypeLossPallas(feat_dim=D2, num_classes=C2, temp=temp2,
                                  use_bf16_matmul=False,
                                  resident_k_threshold=64, max_tile_k=128)
    assert module2.n_k == 2  # K axis actually tiled

    logits2, loss2 = module2(x2, labels=labels2, train_model=True)
    jax.block_until_ready((logits2, loss2))
    ref_logits2, ref_loss2 = _ref_forward(module2.W, temp2, x2, labels2, True)
    np.testing.assert_allclose(np.asarray(logits2), np.asarray(ref_logits2),
                               rtol=1e-4, atol=1e-4)
    np.testing.assert_allclose(np.asarray(loss2), np.asarray(ref_loss2),
                               rtol=1e-5, atol=1e-5)

    probs2, ent2 = module2(x2, train_model=False)
    jax.block_until_ready((probs2, ent2))
    ref_probs2, ref_ent2 = _ref_forward(module2.W, temp2, x2, None, False)
    np.testing.assert_allclose(np.asarray(probs2), np.asarray(ref_probs2),
                               rtol=1e-5, atol=1e-5)
    np.testing.assert_allclose(np.asarray(ent2), np.asarray(ref_ent2),
                               rtol=1e-5, atol=1e-5)

    print("KERNEL_OK")
</pallas_src>

<mosaic_0001>
module attributes {stable_mosaic.version = 11 : i64} {
  func.func @_train_kernel(%arg0: i32, %arg1: i32, %arg2: memref<8x32xf32, #tpu.memory_space<vmem>>, %arg3: memref<32x128xf32, #tpu.memory_space<vmem>>, %arg4: memref<8x1xi32, #tpu.memory_space<vmem>>, %arg5: memref<8x128xf32, #tpu.memory_space<vmem>>, %arg6: memref<1x8xf32, #tpu.memory_space<vmem>>, %arg7: memref<8x128xf32, #tpu.memory_space<vmem>>) attributes {dimension_semantics = [#tpu.dimension_semantics<parallel>, #tpu.dimension_semantics<arbitrary>], iteration_bounds = array<i64: 1, 1>, scalar_prefetch = 0 : i64, scratch_operands = 1 : i64, tpu.core_type = #tpu.core_type<tc>, window_params = [{transform_indices = @transform_0, window_bounds = array<i64: 8, 32>}, {pipeline_mode = #tpu.pipeline_mode<synchronous>, transform_indices = @transform_1, window_bounds = array<i64: 32, 128>}, {transform_indices = @transform_2, window_bounds = array<i64: 8, 1>}, {transform_indices = @transform_3, window_bounds = array<i64: 8, 128>}, {transform_indices = @transform_4, window_bounds = array<i64: 1, 8>}]} {
    %c0_i32 = arith.constant 0 : i32
    %0 = arith.cmpi eq, %arg1, %c0_i32 : i32
    %1 = arith.extui %0 : i1 to i32
    %c0_i32_0 = arith.constant 0 : i32
    %2 = arith.cmpi ne, %1, %c0_i32_0 : i32
    scf.if %2 {
      %cst_10 = arith.constant 0.000000e+00 : f32
      %12 = vector.broadcast %cst_10 : f32 to vector<8x128xf32>
      %c0_11 = arith.constant 0 : index
      %c0_12 = arith.constant 0 : index
      %13 = vector.load %arg7[%c0_11, %c0_12] : memref<8x128xf32, #tpu.memory_space<vmem>>, vector<8x128xf32>
      tpu.vector_store %arg7[%c0_11, %c0_12], %12 {strides = array<i32>} : memref<8x128xf32, #tpu.memory_space<vmem>>, vector<8x128xf32>,
    } else {
    }
    %c0 = arith.constant 0 : index
    %c0_1 = arith.constant 0 : index
    %3 = vector.load %arg7[%c0, %c0_1] : memref<8x128xf32, #tpu.memory_space<vmem>>, vector<8x128xf32>
    %c0_2 = arith.constant 0 : index
    %c0_3 = arith.constant 0 : index
    %4 = vector.load %arg2[%c0_2, %c0_3] : memref<8x32xf32, #tpu.memory_space<vmem>>, vector<8x32xf32>
    %c0_4 = arith.constant 0 : index
    %c0_5 = arith.constant 0 : index
    %5 = vector.load %arg3[%c0_4, %c0_5] : memref<32x128xf32, #tpu.memory_space<vmem>>, vector<32x128xf32>
    %cst = arith.constant dense<0.000000e+00> : vector<8x128xf32>
    %6 = tpu.matmul %4, %5, %cst {dimension_numbers = #tpu.dot_dimension_numbers<[1], [0], [0], [1], [0, 0, 1, 1], [], []>} : vector<8x32xf32>, vector<32x128xf32>, vector<8x128xf32> -> vector<8x128xf32>
    %7 = arith.addf %3, %6 : vector<8x128xf32>
    %c0_6 = arith.constant 0 : index
    %c0_7 = arith.constant 0 : index
    %8 = vector.load %arg7[%c0_6, %c0_7] : memref<8x128xf32, #tpu.memory_space<vmem>>, vector<8x128xf32>
    tpu.vector_store %arg7[%c0_6, %c0_7], %7 {strides = array<i32>} : memref<8x128xf32, #tpu.memory_space<vmem>>, vector<8x128xf32>,
    %c0_i32_8 = arith.constant 0 : i32
    %9 = arith.cmpi eq, %arg1, %c0_i32_8 : i32
    %10 = arith.extui %9 : i1 to i32
    %c0_i32_9 = arith.constant 0 : i32
    %11 = arith.cmpi ne, %10, %c0_i32_9 : i32
    scf.if %11 {
      %c0_10 = arith.constant 0 : index
      %c0_11 = arith.constant 0 : index
      %12 = vector.load %arg7[%c0_10, %c0_11] : memref<8x128xf32, #tpu.memory_space<vmem>>, vector<8x128xf32>
      %c0_12 = arith.constant 0 : index
      %c0_13 = arith.constant 0 : index
      %13 = vector.load %arg5[%c0_12, %c0_13] : memref<8x128xf32, #tpu.memory_space<vmem>>, vector<8x128xf32>
      tpu.vector_store %arg5[%c0_12, %c0_13], %12 {strides = array<i32>} : memref<8x128xf32, #tpu.memory_space<vmem>>, vector<8x128xf32>,
      %14 = tpu.iota {dimensions = array<i32: 1>} : vector<8x128xi32>
      %cst_14 = arith.constant 2.000000e+00 : f32
      %15 = vector.broadcast %cst_14 : f32 to vector<8x128xf32>
      %16 = arith.mulf %12, %15 : vector<8x128xf32>
      %c8_i32 = arith.constant 8 : i32
      %17 = vector.broadcast %c8_i32 : i32 to vector<8x128xi32>
      %18 = arith.cmpi slt, %14, %17 : vector<8x128xi32>
      %cst_15 = arith.constant -1.000000e+30 : f32
      %19 = vector.broadcast %cst_15 : f32 to vector<8x128xf32>
      %20 = arith.select %18, %16, %19 : vector<8x128xi1>, vector<8x128xf32>
      %cst_16 = arith.constant dense<0xFF800000> : vector<8xf32>
      %21 = vector.multi_reduction <maximumf>, %20, %cst_16 [1] : vector<8x128xf32> to vector<8xf32>
      %22 = vector.shape_cast %21 : vector<8xf32> to vector<8x1xf32>
      %23 = vector.broadcast %22 : vector<8x1xf32> to vector<8x128xf32>
      %24 = arith.subf %20, %23 : vector<8x128xf32>
      %25 = math.exp %24 : vector<8x128xf32>
      %cst_17 = arith.constant dense<0.000000e+00> : vector<8xf32>
      %26 = vector.multi_reduction <add>, %25, %cst_17 [1] : vector<8x128xf32> to vector<8xf32>
      %27 = vector.shape_cast %26 : vector<8xf32> to vector<8x1xf32>
      %28 = math.log %27 : vector<8x1xf32>
      %29 = vector.broadcast %28 : vector<8x1xf32> to vector<8x128xf32>
      %30 = arith.subf %24, %29 : vector<8x128xf32>
      %c0_18 = arith.constant 0 : index
      %c0_19 = arith.constant 0 : index
      %31 = vector.load %arg4[%c0_18, %c0_19] : memref<8x1xi32, #tpu.memory_space<vmem>>, vector<8x1xi32>
      %32 = vector.broadcast %31 : vector<8x1xi32> to vector<8x128xi32>
      %33 = arith.cmpi eq, %14, %32 : vector<8x128xi32>
      %cst_20 = arith.constant 0.000000e+00 : f32
      %34 = vector.broadcast %cst_20 : f32 to vector<8x128xf32>
      %35 = arith.select %33, %30, %34 : vector<8x128xi1>, vector<8x128xf32>
      %cst_21 = arith.constant dense<0.000000e+00> : vector<8xf32>
      %36 = vector.multi_reduction <add>, %35, %cst_21 [1] : vector<8x128xf32> to vector<8xf32>
      %cst_22 = arith.constant 0.000000e+00 : f32
      %37 = vector.broadcast %cst_22 : f32 to vector<8xf32>
      %38 = arith.subf %37, %36 : vector<8xf32>
      %39 = vector.shape_cast %38 : vector<8xf32> to vector<1x8xf32>
      %c0_23 = arith.constant 0 : index
      %c0_24 = arith.constant 0 : index
      %40 = vector.load %arg6[%c0_23, %c0_24] : memref<1x8xf32, #tpu.memory_space<vmem>>, vector<1x8xf32>
      tpu.vector_store %arg6[%c0_23, %c0_24], %39 {strides = array<i32>} : memref<1x8xf32, #tpu.memory_space<vmem>>, vector<1x8xf32>,
    } else {
    }
    return
  }
  func.func @transform_0(%arg0: i32, %arg1: i32) -> (i32, i32) {
    %c0_i32 = arith.constant 0 : i32
    return %arg0, %arg1 : i32, i32
  }
  func.func @transform_1(%arg0: i32, %arg1: i32) -> (i32, i32) {
    %c0_i32 = arith.constant 0 : i32
    %c0_i32_0 = arith.constant 0 : i32
    return %arg1, %c0_i32 : i32, i32
  }
  func.func @transform_2(%arg0: i32, %arg1: i32) -> (i32, i32) {
    %c0_i32 = arith.constant 0 : i32
    %c0_i32_0 = arith.constant 0 : i32
    return %arg0, %c0_i32 : i32, i32
  }
  func.func @transform_3(%arg0: i32, %arg1: i32) -> (i32, i32) {
    %c0_i32 = arith.constant 0 : i32
    %c0_i32_0 = arith.constant 0 : i32
    return %arg0, %c0_i32 : i32, i32
  }
  func.func @transform_4(%arg0: i32, %arg1: i32) -> (i32, i32) {
    %c0_i32 = arith.constant 0 : i32
    %c0_i32_0 = arith.constant 0 : i32
    return %c0_i32, %arg0 : i32, i32
  }
}

</mosaic_0001>

<llo_original>
// kernel: tpu_custom_call.1
$region0: #{tpu_custom_call.1}
  #allocation0 [shape = 'u32[]', space=smem, size = 0x4, offset = 0x4, fixed_abs, tag = 'smem constant byte address 0x4 - core index']
  #allocation1 [shape = 'u32[144,128]{1,0:T(1,128)}', space=vmem, size = 0x12000, scoped, tag = 'internal scratch']
  #allocation2 [shape = 'f32[8,128]{1,0:T(8,128)}', space=vmem, size = 0x1000, scoped, tag = 'scratch operand']
  %s0 = inlined_call_operand.vmem [shape: f32[8,32], index: 0, kind: input, shape index: {}]
  %s1 = inlined_call_operand.hbm [shape: f32[32,128], index: 1, kind: input, shape index: {}]
  %s2 = inlined_call_operand.vmem [shape: s32[8,1], index: 2, kind: input, shape index: {}]
  %s3 = inlined_call_operand.hbm [shape: f32[8,128], index: 3, kind: output, shape index: {0}]
  %s4 = inlined_call_operand.hbm [shape: f32[1,8], index: 4, kind: output, shape index: {1}]
  %5 = xla_tuple %s3, %s4
  %s6 = sld [smem:[#allocation0]]
  $region42: #{tpu_custom_call.1} parent=0
    _
  %s8 = ssub.s32 1, %s6
  %s9 = scalar_select 0, %s8, %s6
  $region1: #{tpu_custom_call.1} parent=0
    #allocation3 [shape = 'u8[16384]{0}', space=vmem, size = 0x4000, scoped, tag = 'input window, operand 1, single buffered']
    #allocation4 [shape = 's32[1]{0}', space=sflag, size = 0x4, scoped, tag = 'scoped memory for tpu_custom_call.1']
    #allocation5 [shape = 's32[1]{0}', space=sflag, size = 0x4, scoped, tag = 'scoped memory for tpu_custom_call.1']
    #allocation6 [shape = 'u8[4096]{0}', space=vmem, size = 0x1000, scoped, tag = 'output window, operand 0, single buffered']
    #allocation7 [shape = 'u8[512]{0}', space=vmem, size = 0x400, scoped, tag = 'output window, operand 1, single buffered']
    #allocation8 [shape = 's32[1]{0}', space=sflag, size = 0x4, scoped, tag = 'scoped memory for tpu_custom_call.1']
    %10 = vsyncpa [#allocation4], 0
    %11 = vsyncpa [#allocation5], 0
    %12 = vsyncpa [#allocation8], 0
    // Predicated region
    $region2: #{tpu_custom_call.1} parent=1 // pred_check
      _
    $region3: #{tpu_custom_call.1} parent=1 // pred_check_branch
      %14 = sbr.rel (0) target = $region5
    $region4: #{tpu_custom_call.1} parent=1 // pred_region
      _
    $region5: #{tpu_custom_call.1} parent=1 // pred_fallthru
      _
    // Predicated region
    $region6: #{tpu_custom_call.1} parent=1 // pred_check
      _
    $region7: #{tpu_custom_call.1} parent=1 // pred_check_branch
      %16 = sbr.rel (0) target = $region9
    $region8: #{tpu_custom_call.1} parent=1 // pred_region
      %s18 = ssub.s32 512, 512
      %19 = vsyncadd [#allocation4], %s18
      %s20 = sshll.u32 [#allocation3], 4
      %s21 = int_to_ptr.vmem [resolvable:$true] %s20
      %26 = dma.hbm_to_vmem [thread:$0]  %s1, 512, %s21, [#allocation4], 128, 128, 8
    $region9: #{tpu_custom_call.1} parent=1 // pred_fallthru
      _
    // Predicated region
    $region10: #{tpu_custom_call.1} parent=1 // pred_check
      _
    $region11: #{tpu_custom_call.1} parent=1 // pred_check_branch
      %28 = sbr.rel (0) target = $region13
    $region12: #{tpu_custom_call.1} parent=1 // pred_region
      _
    $region13: #{tpu_custom_call.1} parent=1 // pred_fallthru
      _
    // Predicated region
    $region14: #{tpu_custom_call.1} parent=1 // pred_check
      _
    $region15: #{tpu_custom_call.1} parent=1 // pred_check_branch
      %30 = sbr.rel (0) target = $region17
    $region16: #{tpu_custom_call.1} parent=1 // pred_region
      %31 = dma.done [#allocation4], 512
    $region17: #{tpu_custom_call.1} parent=1 // pred_fallthru
      _
    %p32 = scmp.eq.s32.totalorder 0, 0
    // Predicated region
    $region18: #{tpu_custom_call.1} parent=1 // pred_check
      %p33 = pneg %p32
    $region19: #{tpu_custom_call.1} parent=1 // pred_check_branch
      %35 = sbr.rel (%p33) target = $region21
    $region20: #{tpu_custom_call.1} parent=1 // pred_region
      %36 = vst [vmem:[#allocation2] sm:$0xff] 0.0
    $region21: #{tpu_custom_call.1} parent=1 // pred_fallthru
      _
    %v37 = vld [vmem:[#allocation2] sm:$0xff]
    %v38 = vld [vmem:[%s0] sm:$0xff]
    %v39 = vld [vmem:[#allocation3] sm:$0xff]
    %v40 = vld [vmem:[#allocation3 + $0x8] sm:$0xff]
    %v41 = vld [vmem:[#allocation3 + $0x10] sm:$0xff]
    %v42 = vld [vmem:[#allocation3 + $0x18] sm:$0xff]
    %vm43 = vcmask 261120
    %v45 = vsel %vm43, %v38, 0
    %47 = vmatprep.subr.mxu0 0.0
    %48 = vmatpush1.msra.mxu0 0.0
    %49 = vmatprep.subr.mxu0 0.0
    %50 = vmatpush1.msra.mxu0 0.0
    %51 = vmatprep.subr.mxu0 0.0
    %52 = vmatpush1.msra.mxu0 0.0
    %53 = vmatprep.subr.mxu0 0.0
    %54 = vmatpush1.msra.mxu0 0.0
    %55 = vmatprep.subr.mxu0 0.0
    %56 = vmatpush1.msra.mxu0 0.0
    %57 = vmatprep.subr.mxu0 0.0
    %58 = vmatpush1.msra.mxu0 0.0
    %59 = vmatprep.subr.mxu0 0.0
    %60 = vmatpush1.msra.mxu0 0.0
    %61 = vmatprep.subr.mxu0 0.0
    %62 = vmatpush1.msra.mxu0 0.0
    %63 = vmatprep.subr.mxu0 0.0
    %64 = vmatpush1.msra.mxu0 0.0
    %65 = vmatprep.subr.mxu0 0.0
    %66 = vmatpush1.msra.mxu0 0.0
    %67 = vmatprep.subr.mxu0 0.0
    %68 = vmatpush1.msra.mxu0 0.0
    %69 = vmatprep.subr.mxu0 0.0
    %70 = vmatpush1.msra.mxu0 0.0
    %71 = vmatprep.subr.mxu0 0.0
    %72 = vmatpush1.msra.mxu0 %v42
    %73 = vmatprep.subr.mxu0 0.0
    %74 = vmatpush1.msra.mxu0 %v41
    %75 = vmatprep.subr.mxu0 0.0
    %76 = vmatpush1.msra.mxu0 %v40
    %77 = vmatprep.subr.mxu0 0.0
    %78 = vmatpush1.msra.mxu0 %v39
    %79 = vmatprep.subr.mxu0 0.0
    %80 = vmatpush2.msra.mxu0 0.0
    %81 = vmatprep.subr.mxu0 0.0
    %82 = vmatpush2.msra.mxu0 0.0
    %83 = vmatprep.subr.mxu0 0.0
    %84 = vmatpush2.msra.mxu0 0.0
    %85 = vmatprep.subr.mxu0 0.0
    %86 = vmatpush2.msra.mxu0 0.0
    %87 = vmatprep.subr.mxu0 0.0
    %88 = vmatpush2.msra.mxu0 0.0
    %89 = vmatprep.subr.mxu0 0.0
    %90 = vmatpush2.msra.mxu0 0.0
    %91 = vmatprep.subr.mxu0 0.0
    %92 = vmatpush2.msra.mxu0 0.0
    %93 = vmatprep.subr.mxu0 0.0
    %94 = vmatpush2.msra.mxu0 0.0
    %95 = vmatprep.subr.mxu0 0.0
    %96 = vmatpush2.msra.mxu0 0.0
    %97 = vmatprep.subr.mxu0 0.0
    %98 = vmatpush2.msra.mxu0 0.0
    %99 = vmatprep.subr.mxu0 0.0
    %100 = vmatpush2.msra.mxu0 0.0
    %101 = vmatprep.subr.mxu0 0.0
    %102 = vmatpush2.msra.mxu0 0.0
    %103 = vmatprep.subr.mxu0 0.0
    %104 = vmatpush2.msra.mxu0 0.0
    %105 = vmatprep.subr.mxu0 0.0
    %106 = vmatpush2.msra.mxu0 0.0
    %107 = vmatprep.subr.mxu0 0.0
    %108 = vmatpush2.msra.mxu0 0.0
    %109 = vmatprep.subr.mxu0 0.0
    %110 = vmatpush2.msra.mxu0 0.0
    %111 = vmatprep.mubr.f32.mxu0 0.0
    %112 = vmatmul.mubr.f32.gmra.mxu0 %v45
    %v113 = vpop.f32.mrf.mxu0
    %v114 = vadd.f32 0.0, %v113
    %v115 = vpop.f32.mrf.mxu0
    %116 = vdwg.mxu0
    %v117 = vadd.f32 %v37, %v114
    %118 = vst [vmem:[#allocation2] sm:$0xff] %v117
    // Predicated region
    $region22: #{tpu_custom_call.1} parent=1 // pred_check
      %p119 = pneg %p32
    $region23: #{tpu_custom_call.1} parent=1 // pred_check_branch
      %121 = sbr.rel (%p119) target = $region25
    $region24: #{tpu_custom_call.1} parent=1 // pred_region
      %v122 = vld [vmem:[#allocation2] sm:$0xff]
      %123 = vst [vmem:[#allocation6] sm:$0xff] %v122
      %v124 = vlaneseq
      %v125 = vand.u32 %v124, 127
      %v126 = vmul.f32 %v122, 2.0
      %vm127 = vcmp.lt.s32.totalorder %v125, 8
      %v128 = vsel %vm127, %v126, -1e+30
      %129 = vmax.xlane.f32.xlu0 %v128
      %v130 = vpop.xlane.xlu0 %129
      %v131 = vsub.f32 %v128, %v130
      %v132 = vmul.f32 %v131, 1.442695
      %v133 = vpow.pop %v132
      %134 = vadd.xlane.f32.xlu0 %v133
      %v135 = vpop.xlane.xlu0 %134
      %v136 = vlog2.pop %v135
      %v137 = vmul.f32 %v136, 0.6931472
      %v138 = vsub.f32 %v131, %v137
      %v139 = vld [vmem:[%s2] sm:$0xff]
      %140 = vset.pattern.permute.xlu0 0
      %141 = vperm.xlu0 %140, %v139
      %v142 = vpop.permute.xlu0 %141
      %vm143 = vcmp.eq.s32.totalorder %v125, %v142
      %v144 = vsel %vm143, %v138, 0.0
      %145 = vadd.xlane.f32.xlu0 %v144
      %v146 = vpop.xlane.xlu0 %145
      %v147 = vsub.f32 0.0, %v146
      %v149 = vlaneseq
      %v150 = vshrl.u32 %v149, 7
      %v151 = vsub.s32 %v125, %v150
      %v152 = vrot.slane %v147, %v151
      %vm154 = vcmask 57344
      %155 = vst.msk [vmem:[#allocation7] sm:$0x1] %vm154, %v152
    $region25: #{tpu_custom_call.1} parent=1 // pred_fallthru
      _
    // Predicated region
    $region26: #{tpu_custom_call.1} parent=1 // pred_check
      _
    $region27: #{tpu_custom_call.1} parent=1 // pred_check_branch
      %157 = sbr.rel (0) target = $region29
    $region28: #{tpu_custom_call.1} parent=1 // pred_region
      %s159 = ssub.s32 128, 128
      %160 = vsyncadd [#allocation5], %s159
      %s162 = sshll.u32 [#allocation6], 4
      %s163 = int_to_ptr.vmem [resolvable:$true] %s162
      %165 = dma.vmem_to_hbm [thread:$0]  %s163, 128, %s3, [#allocation5]
    $region29: #{tpu_custom_call.1} parent=1 // pred_fallthru
      _
    // Predicated region
    $region30: #{tpu_custom_call.1} parent=1 // pred_check
      _
    $region31: #{tpu_custom_call.1} parent=1 // pred_check_branch
      %167 = sbr.rel (0) target = $region33
    $region32: #{tpu_custom_call.1} parent=1 // pred_region
      %s169 = ssub.s32 16, 16
      %170 = vsyncadd [#allocation8], %s169
      %s172 = sshll.u32 [#allocation7], 4
      %s173 = int_to_ptr.vmem [resolvable:$true] %s172
      %175 = dma.vmem_to_hbm [thread:$0]  %s173, 16, %s4, [#allocation8]
    $region33: #{tpu_custom_call.1} parent=1 // pred_fallthru
      _
    // Predicated region
    $region34: #{tpu_custom_call.1} parent=1 // pred_check
      _
    $region35: #{tpu_custom_call.1} parent=1 // pred_check_branch
      %177 = sbr.rel (0) target = $region37
    $region36: #{tpu_custom_call.1} parent=1 // pred_region
      %178 = dma.done [#allocation5], 128
    $region37: #{tpu_custom_call.1} parent=1 // pred_fallthru
      _
    // Predicated region
    $region38: #{tpu_custom_call.1} parent=1 // pred_check
      _
    $region39: #{tpu_custom_call.1} parent=1 // pred_check_branch
      %180 = sbr.rel (0) target = $region41
    $region40: #{tpu_custom_call.1} parent=1 // pred_region
      %181 = dma.done [#allocation8], 16
    $region41: #{tpu_custom_call.1} parent=1 // pred_fallthru
      _
    %182 = vsyncpa [#allocation4], 1
    %183 = vsyncpa [#allocation5], 1
    %184 = vsyncpa [#allocation8], 1

</llo_original>
